<compile_context>
chip_gen: v7x
topology: tpu7x:2x2x1
jax: 0.10.0
libtpu: 0.0.40
codegen_flags: <defaults>
</compile_context>

<pallas_src>
import jax
import jax.numpy as jnp
from jax.experimental import pallas as pl
from jax.experimental.pallas import tpu as pltpu


def _round_up(x, m):
    return (x + m - 1) // m * m


def _pick_tile(size, base, cap):
    """Largest power-of-two multiple of `base` dividing `size`, capped at
    `cap`.  `size` is assumed to already be a multiple of `base`."""
    t = base
    while t * 2 <= min(size, cap) and size % (t * 2) == 0:
        t *= 2
    return t


# ---------------------------------------------------------------------------
# Kernel 1: importance MLP  scores = relu(x @ W1 + b1) . w2
# ---------------------------------------------------------------------------
def _mlp_scores_kernel(x_ref, w1_ref, b1_ref, w2_ref, out_ref):
    # (TM, D) @ (D, H) on the MXU, f32 accumulation.
    h = jnp.dot(x_ref[...], w1_ref[...], preferred_element_type=jnp.float32)
    h = jnp.maximum(h + b1_ref[...], 0.0)                        # ReLU (VPU)
    # Second "matmul" has N=1: VPU multiply + cross-lane reduce instead of an
    # MXU pass, stored lane-dense as a (1, 1, TM) block.
    s = jnp.sum(h * w2_ref[...], axis=-1)                        # (TM,)
    out_ref[...] = s.reshape(1, 1, s.shape[0]).astype(out_ref.dtype)


def importance_scores(emb, w1, b1, w2):
    B, S, D = emb.shape
    H = w1.shape[1]
    N = B * S
    x = emb.reshape(N, D)

    # Row tile: 8-aligned, up to 1024 rows; fewer grid steps amortize the
    # ~0.35 us per-step overhead.  W1/b1/w2 have constant index maps so they
    # are fetched once and stay resident.
    TM = min(1024, _round_up(N, 8))
    N_pad = _round_up(N, TM)
    if N_pad != N:
        x = jnp.pad(x, ((0, N_pad - N), (0, 0)))
    G = N_pad // TM

    out = pl.pallas_call(
        _mlp_scores_kernel,
        out_shape=jax.ShapeDtypeStruct((G, 1, TM), jnp.float32),
        grid=(G,),
        in_specs=[
            pl.BlockSpec((TM, D), lambda i: (i, 0)),
            pl.BlockSpec((D, H), lambda i: (0, 0)),
            pl.BlockSpec((1, H), lambda i: (0, 0)),
            pl.BlockSpec((1, H), lambda i: (0, 0)),
        ],
        out_specs=pl.BlockSpec((1, 1, TM), lambda i: (i, 0, 0)),
        compiler_params=pltpu.CompilerParams(
            dimension_semantics=("parallel",),
            vmem_limit_bytes=32 * 1024 * 1024),
    )(x, w1, b1.reshape(1, H), w2.reshape(1, H))
    return out.reshape(N_pad)[:N].reshape(B, S)


# ---------------------------------------------------------------------------
# Kernel 2: broadcast the precomputed membership row over all query rows
# ---------------------------------------------------------------------------
def _pattern_kernel(row_ref, out_ref):
    # row_ref: (1, TJ) membership row for this (b, j-tile); out_ref: (TI, TJ).
    # Pure HBM-writeback: one vector load + lane-dense stores.
    out_ref[...] = jnp.broadcast_to(row_ref[...], out_ref.shape)


_PATTERN_TILE_BYTES = 4 * 1024 * 1024   # 4 MiB f32 per output tile (all gens)


def attention_pattern(top_idx, seq_len, k):
    B = top_idx.shape[0]

    # Precompute the (B, S) membership row in plain JAX (tiny scatter):
    # row[b, j] = 1/k iff j in top_idx[b].  top_k indices are distinct.
    row = jnp.zeros((B, seq_len), jnp.float32)
    row = row.at[jnp.arange(B)[:, None], top_idx].set(jnp.float32(1.0 / k))

    # Pad to (8, 128) alignment so tiles are lane-dense and never fall back to
    # a full-extent (S, S) block for unaligned S.
    SI = _round_up(seq_len, 8)
    SJ = _round_up(seq_len, 128)
    if SJ != seq_len:
        row = jnp.pad(row, ((0, 0), (0, SJ - seq_len)))
    row = row.reshape(B, 1, SJ)

    TJ = _pick_tile(SJ, 128, 2048)                        # <= 2048 lanes
    max_ti = max(8, (_PATTERN_TILE_BYTES // 4) // TJ)     # cap tile at 4 MiB
    TI = _pick_tile(SI, 8, min(1024, max_ti))

    out = pl.pallas_call(
        _pattern_kernel,
        out_shape=jax.ShapeDtypeStruct((B, SI, SJ), jnp.float32),
        grid=(B, SI // TI, SJ // TJ),
        in_specs=[pl.BlockSpec((None, 1, TJ), lambda b, it, jt: (b, 0, jt))],
        out_specs=pl.BlockSpec((None, TI, TJ), lambda b, it, jt: (b, it, jt)),
        compiler_params=pltpu.CompilerParams(
            dimension_semantics=("parallel", "parallel", "parallel"),
            vmem_limit_bytes=32 * 1024 * 1024),
    )(row)
    return out[:, :seq_len, :seq_len]


# ---------------------------------------------------------------------------
# Full forward pass (matches SparseAttentionDemo.forward)
# ---------------------------------------------------------------------------
def sparse_attention_demo(emb, w1, b1, w2, b2, sparsity=0.05):
    del b2  # constant offset: cannot change the top-k ranking; scores unused
    B, S, D = emb.shape
    k = max(1, int(S * sparsity))
    scores = importance_scores(emb, w1, b1, w2)                  # (B, S)
    # TODO(synk): top-k selection kept as plain JAX glue (jax.lax.top_k);
    # matches torch.topk(largest=True) semantics for distinct scores.
    _, top_idx = jax.lax.top_k(scores, k)                        # (B, k)
    pattern = attention_pattern(top_idx, S, k)                   # (B, S, S)
    return pattern, top_idx


# ---------------------------------------------------------------------------
# Pure-JAX reference (mirrors the PyTorch module) for correctness checks
# ---------------------------------------------------------------------------
def _ref_forward(emb, w1, b1, w2, b2, sparsity):
    B, S, _ = emb.shape
    scores = (jnp.maximum(emb @ w1 + b1, 0.0) @ w2 + b2)[..., 0]
    k = max(1, int(S * sparsity))
    _, idx = jax.lax.top_k(scores, k)
    member = (jnp.arange(S)[None, None, :] == idx[:, :, None]).any(axis=1)
    pattern = jnp.broadcast_to(member[:, None, :], (B, S, S)).astype(
        jnp.float32) / k
    return scores, pattern, idx


if __name__ == "__main__":
    sparsity = 0.05

    def make_inputs(key, B, S, D, H=64):
        k_emb, k_w1, k_b1, k_w2, k_b2 = jax.random.split(key, 5)
        emb = jax.random.normal(k_emb, (B, S, D), jnp.float32)
        w1 = jax.random.normal(k_w1, (D, H), jnp.float32) * 0.1
        b1 = jax.random.normal(k_b1, (H,), jnp.float32) * 0.1
        w2 = jax.random.normal(k_w2, (H, 1), jnp.float32) * 0.1
        b2 = jax.random.normal(k_b2, (1,), jnp.float32) * 0.1
        return emb, w1, b1, w2, b2

    # ---- small demo shape (B=2, S=8, D=32), k = 1 -------------------------
    emb, w1, b1, w2, b2 = make_inputs(jax.random.PRNGKey(0), B=2, S=8, D=32)
    pattern, top_idx = sparse_attention_demo(emb, w1, b1, w2, b2, sparsity)
    jax.block_until_ready((pattern, top_idx))

    k = max(1, int(8 * sparsity))
    assert pattern.shape == (2, 8, 8)
    assert top_idx.shape == (2, k)
    assert jnp.allclose(pattern.sum(axis=-1), 1.0)
    _, ref_pat, _ = _ref_forward(emb, w1, b1, w2, b2, sparsity)
    assert jnp.allclose(pattern, ref_pat)

    # ---- larger shape (B=2, S=256): k=12, exercises tiling + padding -------
    emb2, w1b, b1b, w2b, b2b = make_inputs(jax.random.PRNGKey(1),
                                           B=2, S=256, D=32)
    pattern2, top_idx2 = sparse_attention_demo(emb2, w1b, b1b, w2b, b2b,
                                               sparsity)
    jax.block_until_ready((pattern2, top_idx2))
    k2 = max(1, int(256 * sparsity))
    assert pattern2.shape == (2, 256, 256)
    assert top_idx2.shape == (2, k2)
    assert jnp.allclose(pattern2.sum(axis=-1), 1.0, atol=1e-5)

    # kernel scores (without b2) must match reference scores up to the b2 shift
    ref_scores2, _, _ = _ref_forward(emb2, w1b, b1b, w2b, b2b, sparsity)
    ker_scores2 = importance_scores(emb2, w1b, b1b, w2b) + b2b[0]
    assert jnp.allclose(ker_scores2, ref_scores2, atol=2e-3, rtol=2e-3)

    # pattern must exactly reflect the returned top-k index set
    member2 = (jnp.arange(256)[None, None, :] ==
               top_idx2[:, :, None]).any(axis=1)
    expect2 = jnp.broadcast_to(member2[:, None, :],
                               (2, 256, 256)).astype(jnp.float32) / k2
    assert jnp.allclose(pattern2, expect2)

    print("KERNEL_OK")
</pallas_src>

<mosaic_0001>
module attributes {stable_mosaic.version = 11 : i64} {
  func.func @_mlp_scores_kernel(%arg0: i32, %arg1: memref<16x32xf32, #tpu.memory_space<vmem>>, %arg2: memref<32x64xf32, #tpu.memory_space<vmem>>, %arg3: memref<1x64xf32, #tpu.memory_space<vmem>>, %arg4: memref<1x64xf32, #tpu.memory_space<vmem>>, %arg5: memref<1x1x16xf32, #tpu.memory_space<vmem>>) attributes {dimension_semantics = [#tpu.dimension_semantics<parallel>], iteration_bounds = array<i64: 1>, scalar_prefetch = 0 : i64, scratch_operands = 0 : i64, tpu.core_type = #tpu.core_type<tc>, window_params = [{transform_indices = @transform_0, window_bounds = array<i64: 16, 32>}, {pipeline_mode = #tpu.pipeline_mode<synchronous>, transform_indices = @transform_1, window_bounds = array<i64: 32, 64>}, {pipeline_mode = #tpu.pipeline_mode<synchronous>, transform_indices = @transform_2, window_bounds = array<i64: 1, 64>}, {pipeline_mode = #tpu.pipeline_mode<synchronous>, transform_indices = @transform_3, window_bounds = array<i64: 1, 64>}, {transform_indices = @transform_4, window_bounds = array<i64: 1, 1, 16>}]} {
    %c0 = arith.constant 0 : index
    %c0_0 = arith.constant 0 : index
    %0 = vector.load %arg1[%c0, %c0_0] : memref<16x32xf32, #tpu.memory_space<vmem>>, vector<16x32xf32>
    %c0_1 = arith.constant 0 : index
    %c0_2 = arith.constant 0 : index
    %1 = vector.load %arg2[%c0_1, %c0_2] : memref<32x64xf32, #tpu.memory_space<vmem>>, vector<32x64xf32>
    %cst = arith.constant dense<0.000000e+00> : vector<16x64xf32>
    %2 = tpu.matmul %0, %1, %cst {dimension_numbers = #tpu.dot_dimension_numbers<[1], [0], [0], [1], [0, 0, 1, 1], [], []>} : vector<16x32xf32>, vector<32x64xf32>, vector<16x64xf32> -> vector<16x64xf32>
    %c0_3 = arith.constant 0 : index
    %c0_4 = arith.constant 0 : index
    %3 = vector.load %arg3[%c0_3, %c0_4] : memref<1x64xf32, #tpu.memory_space<vmem>>, vector<1x64xf32>
    %4 = vector.broadcast %3 : vector<1x64xf32> to vector<16x64xf32>
    %5 = arith.addf %2, %4 : vector<16x64xf32>
    %cst_5 = arith.constant 0.000000e+00 : f32
    %6 = vector.broadcast %cst_5 : f32 to vector<16x64xf32>
    %7 = arith.maximumf %5, %6 : vector<16x64xf32>
    %c0_6 = arith.constant 0 : index
    %c0_7 = arith.constant 0 : index
    %8 = vector.load %arg4[%c0_6, %c0_7] : memref<1x64xf32, #tpu.memory_space<vmem>>, vector<1x64xf32>
    %9 = vector.broadcast %8 : vector<1x64xf32> to vector<16x64xf32>
    %10 = arith.mulf %7, %9 : vector<16x64xf32>
    %cst_8 = arith.constant dense<0.000000e+00> : vector<16xf32>
    %11 = vector.multi_reduction <add>, %10, %cst_8 [1] : vector<16x64xf32> to vector<16xf32>
    %12 = vector.shape_cast %11 : vector<16xf32> to vector<1x1x16xf32>
    %c0_9 = arith.constant 0 : index
    %c0_10 = arith.constant 0 : index
    %c0_11 = arith.constant 0 : index
    %13 = vector.load %arg5[%c0_9, %c0_10, %c0_11] : memref<1x1x16xf32, #tpu.memory_space<vmem>>, vector<1x1x16xf32>
    tpu.vector_store %arg5[%c0_9, %c0_10, %c0_11], %12 {strides = array<i32>} : memref<1x1x16xf32, #tpu.memory_space<vmem>>, vector<1x1x16xf32>,
    return
  }
  func.func @transform_0(%arg0: i32) -> (i32, i32) {
    %c0_i32 = arith.constant 0 : i32
    %c0_i32_0 = arith.constant 0 : i32
    return %arg0, %c0_i32 : i32, i32
  }
  func.func @transform_1(%arg0: i32) -> (i32, i32) {
    %c0_i32 = arith.constant 0 : i32
    %c0_i32_0 = arith.constant 0 : i32
    %c0_i32_1 = arith.constant 0 : i32
    return %c0_i32, %c0_i32_0 : i32, i32
  }
  func.func @transform_2(%arg0: i32) -> (i32, i32) {
    %c0_i32 = arith.constant 0 : i32
    %c0_i32_0 = arith.constant 0 : i32
    %c0_i32_1 = arith.constant 0 : i32
    return %c0_i32, %c0_i32_0 : i32, i32
  }
  func.func @transform_3(%arg0: i32) -> (i32, i32) {
    %c0_i32 = arith.constant 0 : i32
    %c0_i32_0 = arith.constant 0 : i32
    %c0_i32_1 = arith.constant 0 : i32
    return %c0_i32, %c0_i32_0 : i32, i32
  }
  func.func @transform_4(%arg0: i32) -> (i32, i32, i32) {
    %c0_i32 = arith.constant 0 : i32
    %c0_i32_0 = arith.constant 0 : i32
    %c0_i32_1 = arith.constant 0 : i32
    return %arg0, %c0_i32, %c0_i32_0 : i32, i32, i32
  }
}

</mosaic_0001>

<llo_original>
// kernel: tpu_custom_call.1
$region0: #{tpu_custom_call.1}
  #allocation0 [shape = 'u32[]', space=smem, size = 0x4, offset = 0x4, fixed_abs, tag = 'smem constant byte address 0x4 - core index']
  #allocation1 [shape = 'u32[144,128]{1,0:T(1,128)}', space=vmem, size = 0x12000, scoped, tag = 'internal scratch']
  %s0 = inlined_call_operand.hbm [shape: f32[16,32], index: 0, kind: input, shape index: {}]
  %s1 = inlined_call_operand.hbm [shape: f32[32,64], index: 1, kind: input, shape index: {}]
  %s2 = inlined_call_operand.vmem [shape: f32[1,64], index: 2, kind: input, shape index: {}]
  %s3 = inlined_call_operand.vmem [shape: f32[1,64], index: 3, kind: input, shape index: {}]
  %s4 = inlined_call_operand.hbm [shape: f32[1,1,16], index: 4, kind: output, shape index: {}]
  %s5 = sld [smem:[#allocation0]]
  $region34: #{tpu_custom_call.1} parent=0
    _
  %s7 = ssub.s32 1, %s5
  %s8 = scalar_select 0, %s7, %s5
  $region1: #{tpu_custom_call.1} parent=0
    #allocation2 [shape = 'u8[8192]{0}', space=vmem, size = 0x2000, scoped, tag = 'input window, operand 0, single buffered']
    #allocation3 [shape = 's32[1]{0}', space=sflag, size = 0x4, scoped, tag = 'scoped memory for tpu_custom_call.1']
    #allocation4 [shape = 's32[1]{0}', space=sflag, size = 0x4, scoped, tag = 'scoped memory for tpu_custom_call.1']
    #allocation5 [shape = 'u8[16384]{0}', space=vmem, size = 0x4000, scoped, tag = 'input window, operand 1, single buffered']
    #allocation6 [shape = 's32[1]{0}', space=sflag, size = 0x4, scoped, tag = 'scoped memory for tpu_custom_call.1']
    #allocation7 [shape = 'u8[512]{0}', space=vmem, size = 0x400, scoped, tag = 'output window, operand 0, single buffered']
    %9 = vsyncpa [#allocation3], 0
    %10 = vsyncpa [#allocation6], 0
    %11 = vsyncpa [#allocation4], 0
    // Predicated region
    $region2: #{tpu_custom_call.1} parent=1 // pred_check
      _
    $region3: #{tpu_custom_call.1} parent=1 // pred_check_branch
      %13 = sbr.rel (0) target = $region5
    $region4: #{tpu_custom_call.1} parent=1 // pred_region
      %s15 = ssub.s32 256, 256
      %16 = vsyncadd [#allocation3], %s15
      %s17 = sshll.u32 [#allocation2], 4
      %s18 = int_to_ptr.vmem [resolvable:$true] %s17
      %23 = dma.hbm_to_vmem [thread:$0]  %s0, 256, %s18, [#allocation3], 128, 128, 8
    $region5: #{tpu_custom_call.1} parent=1 // pred_fallthru
      _
    // Predicated region
    $region6: #{tpu_custom_call.1} parent=1 // pred_check
      _
    $region7: #{tpu_custom_call.1} parent=1 // pred_check_branch
      %25 = sbr.rel (0) target = $region9
    $region8: #{tpu_custom_call.1} parent=1 // pred_region
      %s27 = ssub.s32 512, 512
      %28 = vsyncadd [#allocation6], %s27
      %s29 = sshll.u32 [#allocation5], 4
      %s30 = int_to_ptr.vmem [resolvable:$true] %s29
      %35 = dma.hbm_to_vmem [thread:$0]  %s1, 512, %s30, [#allocation6], 128, 128, 8
    $region9: #{tpu_custom_call.1} parent=1 // pred_fallthru
      _
    // Predicated region
    $region10: #{tpu_custom_call.1} parent=1 // pred_check
      _
    $region11: #{tpu_custom_call.1} parent=1 // pred_check_branch
      %37 = sbr.rel (0) target = $region13
    $region12: #{tpu_custom_call.1} parent=1 // pred_region
      _
    $region13: #{tpu_custom_call.1} parent=1 // pred_fallthru
      _
    // Predicated region
    $region14: #{tpu_custom_call.1} parent=1 // pred_check
      _
    $region15: #{tpu_custom_call.1} parent=1 // pred_check_branch
      %39 = sbr.rel (0) target = $region17
    $region16: #{tpu_custom_call.1} parent=1 // pred_region
      _
    $region17: #{tpu_custom_call.1} parent=1 // pred_fallthru
      _
    // Predicated region
    $region18: #{tpu_custom_call.1} parent=1 // pred_check
      _
    $region19: #{tpu_custom_call.1} parent=1 // pred_check_branch
      %41 = sbr.rel (0) target = $region21
    $region20: #{tpu_custom_call.1} parent=1 // pred_region
      %42 = dma.done [#allocation3], 256
    $region21: #{tpu_custom_call.1} parent=1 // pred_fallthru
      _
    // Predicated region
    $region22: #{tpu_custom_call.1} parent=1 // pred_check
      _
    $region23: #{tpu_custom_call.1} parent=1 // pred_check_branch
      %44 = sbr.rel (0) target = $region25
    $region24: #{tpu_custom_call.1} parent=1 // pred_region
      %45 = dma.done [#allocation6], 512
    $region25: #{tpu_custom_call.1} parent=1 // pred_fallthru
      _
    %v46 = vld [vmem:[#allocation2] sm:$0xff]
    %v47 = vld [vmem:[#allocation2 + $0x8] sm:$0xff]
    %v48 = vld [vmem:[#allocation5] sm:$0xff]
    %v49 = vld [vmem:[#allocation5 + $0x8] sm:$0xff]
    %v50 = vld [vmem:[#allocation5 + $0x10] sm:$0xff]
    %v51 = vld [vmem:[#allocation5 + $0x18] sm:$0xff]
    %v52 = vld [vmem:[%s2] sm:$0x1]
    %v54 = vlaneseq
    %v55 = vshrl.u32 %v54, 7
    %v56 = vsub.s32 0, %v55
    %v57 = vrot.slane %v52, %v56
    %vm59 = vcmask 261120
    %v61 = vsel %vm59, %v46, 0
    %v64 = vsel %vm59, %v47, 0
    %66 = vmatprep.subr.mxu0 0.0
    %67 = vmatpush1.msra.mxu0 %v48
    %68 = vmatprep.subr.mxu0 0.0
    %69 = vmatpush1.msra.mxu0 %v49
    %70 = vmatprep.subr.mxu0 0.0
    %71 = vmatpush1.msra.mxu0 %v50
    %72 = vmatprep.subr.mxu0 0.0
    %73 = vmatpush1.msra.mxu0 %v51
    %74 = vmatprep.subr.mxu0 0.0
    %75 = vmatpush1.msra.mxu0 0.0
    %76 = vmatprep.subr.mxu0 0.0
    %77 = vmatpush1.msra.mxu0 0.0
    %78 = vmatprep.subr.mxu0 0.0
    %79 = vmatpush1.msra.mxu0 0.0
    %80 = vmatprep.subr.mxu0 0.0
    %81 = vmatpush1.msra.mxu0 0.0
    %82 = vmatprep.subr.mxu0 0.0
    %83 = vmatpush1.msra.mxu0 0.0
    %84 = vmatprep.subr.mxu0 0.0
    %85 = vmatpush1.msra.mxu0 0.0
    %86 = vmatprep.subr.mxu0 0.0
    %87 = vmatpush1.msra.mxu0 0.0
    %88 = vmatprep.subr.mxu0 0.0
    %89 = vmatpush1.msra.mxu0 0.0
    %90 = vmatprep.subr.mxu0 0.0
    %91 = vmatpush1.msra.mxu0 0.0
    %92 = vmatprep.subr.mxu0 0.0
    %93 = vmatpush1.msra.mxu0 0.0
    %94 = vmatprep.subr.mxu0 0.0
    %95 = vmatpush1.msra.mxu0 0.0
    %96 = vmatprep.subr.mxu0 0.0
    %97 = vmatpush1.msra.mxu0 0.0
    %98 = vmatprep.subr.mxu0 0.0
    %99 = vmatpush1.msra.mxu0 0.0
    %100 = vmatprep.subr.mxu0 0.0
    %101 = vmatpush1.msra.mxu0 0.0
    %102 = vmatprep.subr.mxu0 0.0
    %103 = vmatpush1.msra.mxu0 0.0
    %104 = vmatprep.subr.mxu0 0.0
    %105 = vmatpush1.msra.mxu0 0.0
    %106 = vmatprep.subr.mxu0 0.0
    %107 = vmatpush1.msra.mxu0 0.0
    %108 = vmatprep.subr.mxu0 0.0
    %109 = vmatpush1.msra.mxu0 0.0
    %110 = vmatprep.subr.mxu0 0.0
    %111 = vmatpush1.msra.mxu0 0.0
    %112 = vmatprep.subr.mxu0 0.0
    %113 = vmatpush1.msra.mxu0 0.0
    %114 = vmatprep.subr.mxu0 0.0
    %115 = vmatpush1.msra.mxu0 0.0
    %116 = vmatprep.subr.mxu0 0.0
    %117 = vmatpush1.msra.mxu0 0.0
    %118 = vmatprep.subr.mxu0 0.0
    %119 = vmatpush1.msra.mxu0 0.0
    %120 = vmatprep.subr.mxu0 0.0
    %121 = vmatpush1.msra.mxu0 0.0
    %122 = vmatprep.subr.mxu0 0.0
    %123 = vmatpush1.msra.mxu0 0.0
    %124 = vmatprep.subr.mxu0 0.0
    %125 = vmatpush1.msra.mxu0 0.0
    %126 = vmatprep.subr.mxu0 0.0
    %127 = vmatpush1.msra.mxu0 0.0
    %128 = vmatprep.subr.mxu0 0.0
    %129 = vmatpush1.msra.mxu0 0.0
    %130 = vmatprep.mubr.f32.mxu0 0.0
    %131 = vmatmul.mubr.f32.gmra.mrb[0].mxu0 %v61
    %v132 = vpop.f32.mrb[0].mxu0
    %v133 = vadd.f32 %v57, %v132
    %v134 = vpop.f32.mrb[0].mxu0
    %135 = vmatprep.mubr.f32.mxu0 0.0
    %136 = vmatmul.mubr.f32.gmra.mrb[0].mxu0 %v64
    %v137 = vpop.f32.mrb[0].mxu0
    %v138 = vadd.f32 %v57, %v137
    %v139 = vpop.f32.mrb[0].mxu0
    %140 = vdwg.mxu0
    %v141 = vmax.f32 %v133, 0.0
    %v142 = vmax.f32 %v138, 0.0
    %v143 = vld [vmem:[%s3] sm:$0x1]
    %v145 = vlaneseq
    %v146 = vshrl.u32 %v145, 7
    %v147 = vsub.s32 0, %v146
    %v148 = vrot.slane %v143, %v147
    %v150 = vmul.f32 %v141, %v148
    %v151 = vmul.f32 %v142, %v148
    %vm152 = vcmask 523264
    %v153 = vsel %vm152, %v150, 0.0
    %154 = vadd.xlane.f32.xlu0 %v153
    %v155 = vpop.xlane.xlu0 %154
    %v156 = vsel %vm152, %v151, 0.0
    %157 = vadd.xlane.f32.xlu0 %v156
    %v158 = vpop.xlane.xlu0 %157
    %v161 = vlaneseq
    %v162 = vand.u32 %v161, 127
    %v163 = vlaneseq
    %v164 = vshrl.u32 %v163, 7
    %v165 = vsub.s32 %v162, %v164
    %v166 = vrot.slane %v155, %v165
    %v167 = vadd.s32 %v162, 4294967288
    %v168 = vlaneseq
    %v169 = vshrl.u32 %v168, 7
    %v170 = vsub.s32 %v167, %v169
    %v171 = vrot.slane %v158, %v170
    %vm172 = vcmask 130112
    %v173 = vsel %vm172, %v171, %v166
    %vm175 = vcmask 122880
    %176 = vst.msk [vmem:[#allocation7] sm:$0x1] %vm175, %v173
    // Predicated region
    $region26: #{tpu_custom_call.1} parent=1 // pred_check
      _
    $region27: #{tpu_custom_call.1} parent=1 // pred_check_branch
      %178 = sbr.rel (0) target = $region29
    $region28: #{tpu_custom_call.1} parent=1 // pred_region
      %s180 = ssub.s32 16, 16
      %181 = vsyncadd [#allocation4], %s180
      %s183 = sshll.u32 [#allocation7], 4
      %s184 = int_to_ptr.vmem [resolvable:$true] %s183
      %186 = dma.vmem_to_hbm [thread:$0]  %s184, 16, %s4, [#allocation4]
    $region29: #{tpu_custom_call.1} parent=1 // pred_fallthru
      _
    // Predicated region
    $region30: #{tpu_custom_call.1} parent=1 // pred_check
      _
    $region31: #{tpu_custom_call.1} parent=1 // pred_check_branch
      %188 = sbr.rel (0) target = $region33
    $region32: #{tpu_custom_call.1} parent=1 // pred_region
      %189 = dma.done [#allocation4], 16
    $region33: #{tpu_custom_call.1} parent=1 // pred_fallthru
      _
    %190 = vsyncpa [#allocation3], 1
    %191 = vsyncpa [#allocation6], 1
    %192 = vsyncpa [#allocation4], 1

</llo_original>
